<compile_context>
chip_gen: v6e
topology: v6e:2x2x1
jax: 0.10.0
libtpu: 0.0.40
codegen_flags: <defaults>
</compile_context>

<pallas_src>
import functools

import jax
import jax.numpy as jnp
from jax.experimental import pallas as pl
from jax.experimental.pallas import tpu as pltpu

HIDDEN = 128


def _round_up(a: int, b: int) -> int:
    return ((a + b - 1) // b) * b


def _dqn_kernel(x_ref, w1_ref, b1_ref, w2_ref, b2_ref, wh_ref, bh_ref,
                out_ref, *psum_refs, batch, output_dim, block_rows, fuse_mean):
    cdt = w1_ref.dtype

    # x streams in as f32; cast to the MXU compute dtype in-kernel (free: HBM-bound kernel).
    x = x_ref[...].astype(cdt)

    # fc1 + relu (MXU, f32 accumulate; bias/relu in f32 -> v5e-friendly)
    h1 = jnp.dot(x, w1_ref[...], preferred_element_type=jnp.float32) + b1_ref[...]
    h1 = jnp.maximum(h1, 0.0).astype(cdt)

    # fc2 + relu
    h2 = jnp.dot(h1, w2_ref[...], preferred_element_type=jnp.float32) + b2_ref[...]
    h2 = jnp.maximum(h2, 0.0).astype(cdt)

    # fused, lane-dense head: cols [0:output_dim) = advantage, col `output_dim` = value, rest 0.
    head = jnp.dot(h2, wh_ref[...], preferred_element_type=jnp.float32) + bh_ref[...]

    rows = jax.lax.broadcasted_iota(jnp.int32, head.shape, 0) + pl.program_id(0) * block_rows
    cols = jax.lax.broadcasted_iota(jnp.int32, head.shape, 1)

    # value column broadcast to (tb, 1) via a masked lane reduce (XLU slot, off critical path)
    val = jnp.sum(jnp.where(cols == output_dim, head, 0.0), axis=1, keepdims=True)

    # advantage sum masked to real rows (< batch) and real action columns (< output_dim);
    # the tail tile's out-of-bounds rows (unspecified values) never contribute.
    adv_masked = jnp.where((rows < batch) & (cols < output_dim), head, 0.0)
    adv_sum = jnp.sum(jnp.sum(adv_masked, axis=1, keepdims=True), axis=0, keepdims=True)  # (1,1)

    if fuse_mean:
        # grid == 1: the advantage mean is global to this tile -> fully fuse the epilogue.
        mean = adv_sum * (1.0 / float(batch * output_dim))
        out_ref[...] = (head + val - mean).astype(out_ref.dtype)
    else:
        # multi-tile: emit (value + advantage) plus per-tile f32 advantage partial sums;
        # the global mean is formed from the partial sums in a trivial XLA epilogue.
        out_ref[...] = (head + val).astype(out_ref.dtype)
        psum_refs[0][...] = jnp.broadcast_to(adv_sum, psum_refs[0].shape)


def prepare_params(params, compute_dtype=jnp.bfloat16):
    """One-time packing of torch-layout (out, in) weights into kernel layout (hoisted off the
    forward hot path): transposed weights, fused + lane-padded head, f32 biases."""
    hidden = params["w1"].shape[0]
    input_dim = params["w1"].shape[1]
    output_dim = params["wa"].shape[0]
    n_head_pad = _round_up(max(output_dim + 1, 128), 128)

    w1 = params["w1"].T.astype(compute_dtype)                 # (in, H)
    b1 = params["b1"].reshape(1, hidden).astype(jnp.float32)
    w2 = params["w2"].T.astype(compute_dtype)                 # (H, H)
    b2 = params["b2"].reshape(1, hidden).astype(jnp.float32)

    wh = jnp.zeros((hidden, n_head_pad), jnp.float32)
    wh = wh.at[:, :output_dim].set(params["wa"].T)            # advantage columns
    wh = wh.at[:, output_dim].set(params["wv"][0])            # value column
    wh = wh.astype(compute_dtype)
    bh = jnp.zeros((1, n_head_pad), jnp.float32)
    bh = bh.at[0, :output_dim].set(params["ba"])
    bh = bh.at[0, output_dim].set(params["bv"][0])

    return dict(w1=w1, b1=b1, w2=w2, b2=b2, wh=wh, bh=bh,
                input_dim=input_dim, hidden=hidden,
                output_dim=output_dim, n_head_pad=n_head_pad)


def dueling_dqn_forward(x, packed, *, block_b=2048, out_dtype=jnp.float32):
    """x: (B, input_dim) float32. packed: output of prepare_params()."""
    B, input_dim = x.shape
    assert input_dim == packed["input_dim"]
    hidden = packed["hidden"]
    output_dim = packed["output_dim"]
    n_head_pad = packed["n_head_pad"]
    cd_bytes = jnp.dtype(packed["w1"].dtype).itemsize
    out_bytes = jnp.dtype(out_dtype).itemsize

    # batch tile: multiple of 8 sublanes; large by default to amortize per-step pipeline cost.
    tb = _round_up(min(block_b, _round_up(B, 8)), 8)
    nt = -(-B // tb)                 # grid length; Pallas pads/clips the tail block
    fuse_mean = nt == 1

    kernel = functools.partial(_dqn_kernel, batch=B, output_dim=output_dim,
                               block_rows=tb, fuse_mean=fuse_mean)

    in_specs = [
        pl.BlockSpec((tb, input_dim), lambda i: (i, 0)),       # x: streamed per tile (f32)
        pl.BlockSpec((input_dim, hidden), lambda i: (0, 0)),   # weights: VMEM-resident
        pl.BlockSpec((1, hidden), lambda i: (0, 0)),
        pl.BlockSpec((hidden, hidden), lambda i: (0, 0)),
        pl.BlockSpec((1, hidden), lambda i: (0, 0)),
        pl.BlockSpec((hidden, n_head_pad), lambda i: (0, 0)),
        pl.BlockSpec((1, n_head_pad), lambda i: (0, 0)),
    ]
    head_shape = jax.ShapeDtypeStruct((B, n_head_pad), out_dtype)
    head_spec = pl.BlockSpec((tb, n_head_pad), lambda i: (i, 0))
    if fuse_mean:
        out_shape, out_specs = head_shape, head_spec
    else:
        out_shape = (head_shape, jax.ShapeDtypeStruct((nt * 8, 128), jnp.float32))
        out_specs = (head_spec, pl.BlockSpec((8, 128), lambda i: (i, 0)))

    # Explicit VMEM budget (v7x: 64 MiB physical / 32 MiB scoped default).
    vmem_needed = (
        2 * tb * input_dim * 4                                   # x double-buffer (f32)
        + 2 * tb * n_head_pad * out_bytes                        # head double-buffer
        + 2 * 8 * 128 * 4                                        # psums double-buffer
        + (input_dim + hidden + n_head_pad) * hidden * cd_bytes  # resident weights
        + (2 * hidden + n_head_pad) * 4                          # biases
        + 6 * tb * max(hidden, n_head_pad) * 4                   # in-kernel temporaries
    )
    vmem_limit = int(min(max(vmem_needed + (8 << 20), 32 << 20), 56 << 20))

    flops = 2 * B * (input_dim * hidden + hidden * hidden + hidden * n_head_pad)
    bytes_accessed = (
        B * input_dim * 4
        + (input_dim + hidden + n_head_pad) * hidden * cd_bytes
        + (2 * hidden + n_head_pad) * 4
        + B * n_head_pad * out_bytes
        + (0 if fuse_mean else nt * 8 * 128 * 4)
    )

    result = pl.pallas_call(
        kernel,
        out_shape=out_shape,
        grid_spec=pltpu.PrefetchScalarGridSpec(
            num_scalar_prefetch=0,
            grid=(nt,),
            in_specs=in_specs,
            out_specs=out_specs,
        ),
        compiler_params=pltpu.CompilerParams(
            dimension_semantics=("parallel",),   # independent batch tiles (megacore on v7x)
            vmem_limit_bytes=vmem_limit,
        ),
        cost_estimate=pl.CostEstimate(
            flops=flops, transcendentals=0, bytes_accessed=bytes_accessed),
    )(x, packed["w1"], packed["b1"], packed["w2"], packed["b2"], packed["wh"], packed["bh"])

    if fuse_mean:
        return result[:, :output_dim]            # epilogue: a single slice

    head, psums = result
    # each tile broadcast its partial advantage sum across its 8x128 psum block
    mean = jnp.sum(psums) / (8.0 * 128.0 * B * output_dim)
    return (head[:, :output_dim].astype(jnp.float32) - mean).astype(out_dtype)


def init_params(key, input_dim, output_dim):
    """Deterministic init mimicking torch.nn.Linear default (U[-1/sqrt(fan_in), +1/sqrt(fan_in)])."""
    ks = jax.random.split(key, 8)

    def lin(kw, kb, fan_in, fan_out):
        bound = 1.0 / jnp.sqrt(fan_in)
        w = jax.random.uniform(kw, (fan_out, fan_in), jnp.float32, -bound, bound)
        b = jax.random.uniform(kb, (fan_out,), jnp.float32, -bound, bound)
        return w, b

    w1, b1 = lin(ks[0], ks[1], input_dim, HIDDEN)
    w2, b2 = lin(ks[2], ks[3], HIDDEN, HIDDEN)
    wa, ba = lin(ks[4], ks[5], HIDDEN, output_dim)
    wv, bv = lin(ks[6], ks[7], HIDDEN, 1)
    return dict(w1=w1, b1=b1, w2=w2, b2=b2, wa=wa, ba=ba, wv=wv, bv=bv)


def reference_forward_f32(x, p):
    """Pure-f32 torch-semantics reference."""
    h1 = jnp.maximum(x @ p["w1"].T + p["b1"], 0.0)
    h2 = jnp.maximum(h1 @ p["w2"].T + p["b2"], 0.0)
    adv = h2 @ p["wa"].T + p["ba"]
    val = h2 @ p["wv"].T + p["bv"]
    return val + adv - jnp.mean(adv)


def reference_forward_matched(x, p, compute_dtype):
    """Reference with the same bf16-operand / f32-accumulate matmul precision as the kernel."""
    cd = compute_dtype
    dot = functools.partial(jnp.dot, preferred_element_type=jnp.float32)
    h1 = jnp.maximum(dot(x.astype(cd), p["w1"].T.astype(cd)) + p["b1"], 0.0)
    h2 = jnp.maximum(dot(h1.astype(cd), p["w2"].T.astype(cd)) + p["b2"], 0.0)
    adv = dot(h2.astype(cd), p["wa"].T.astype(cd)) + p["ba"]
    val = dot(h2.astype(cd), p["wv"].T.astype(cd)) + p["bv"]
    return val + adv - jnp.mean(adv)


if __name__ == "__main__":
    key = jax.random.PRNGKey(0)
    k_param, k_x, k_x2 = jax.random.split(key, 3)

    input_dim = 16
    output_dim = 4

    params = init_params(k_param, input_dim, output_dim)
    packed = prepare_params(params)          # one-time weight packing (off the hot path)

    # ---- single-tile (fully fused mean) path: the common RL inference batch ----
    batch = 2
    x = jax.random.normal(k_x, (batch, input_dim), jnp.float32)
    out = jax.block_until_ready(dueling_dqn_forward(x, packed))
    assert out.shape == (batch, output_dim)
    assert jnp.allclose(out, reference_forward_matched(x, params, jnp.bfloat16),
                        atol=2e-3, rtol=2e-3), "single-tile mismatch vs matched reference"
    assert jnp.allclose(out, reference_forward_f32(x, params),
                        atol=2e-2, rtol=2e-2), "single-tile mismatch vs f32 reference"

    # ---- multi-tile (partial-sum) path: forces grid > 1 and a ragged tail tile ----
    batch2 = 20
    x2 = jax.random.normal(k_x2, (batch2, input_dim), jnp.float32)
    out2 = jax.block_until_ready(dueling_dqn_forward(x2, packed, block_b=8))
    assert out2.shape == (batch2, output_dim)
    assert jnp.allclose(out2, reference_forward_matched(x2, params, jnp.bfloat16),
                        atol=2e-3, rtol=2e-3), "multi-tile mismatch vs matched reference"
    assert jnp.allclose(out2, reference_forward_f32(x2, params),
                        atol=2e-2, rtol=2e-2), "multi-tile mismatch vs f32 reference"

    print("KERNEL_OK")
</pallas_src>

<mosaic_0001>
module attributes {stable_mosaic.version = 11 : i64} {
  func.func @_dqn_kernel(%arg0: i32, %arg1: memref<8x16xf32, #tpu.memory_space<vmem>>, %arg2: memref<16x128xbf16, #tpu.memory_space<vmem>>, %arg3: memref<1x128xf32, #tpu.memory_space<vmem>>, %arg4: memref<128x128xbf16, #tpu.memory_space<vmem>>, %arg5: memref<1x128xf32, #tpu.memory_space<vmem>>, %arg6: memref<128x128xbf16, #tpu.memory_space<vmem>>, %arg7: memref<1x128xf32, #tpu.memory_space<vmem>>, %arg8: memref<8x128xf32, #tpu.memory_space<vmem>>) attributes {dimension_semantics = [#tpu.dimension_semantics<parallel>], iteration_bounds = array<i64: 1>, scalar_prefetch = 0 : i64, scratch_operands = 0 : i64, tpu.core_type = #tpu.core_type<tc>, window_params = [{transform_indices = @transform_0, window_bounds = array<i64: 8, 16>}, {pipeline_mode = #tpu.pipeline_mode<synchronous>, transform_indices = @transform_1, window_bounds = array<i64: 16, 128>}, {pipeline_mode = #tpu.pipeline_mode<synchronous>, transform_indices = @transform_2, window_bounds = array<i64: 1, 128>}, {pipeline_mode = #tpu.pipeline_mode<synchronous>, transform_indices = @transform_3, window_bounds = array<i64: 128, 128>}, {pipeline_mode = #tpu.pipeline_mode<synchronous>, transform_indices = @transform_4, window_bounds = array<i64: 1, 128>}, {pipeline_mode = #tpu.pipeline_mode<synchronous>, transform_indices = @transform_5, window_bounds = array<i64: 128, 128>}, {pipeline_mode = #tpu.pipeline_mode<synchronous>, transform_indices = @transform_6, window_bounds = array<i64: 1, 128>}, {transform_indices = @transform_7, window_bounds = array<i64: 8, 128>}]} {
    %c0 = arith.constant 0 : index
    %c0_0 = arith.constant 0 : index
    %0 = vector.load %arg1[%c0, %c0_0] : memref<8x16xf32, #tpu.memory_space<vmem>>, vector<8x16xf32>
    %1 = arith.truncf %0 : vector<8x16xf32> to vector<8x16xbf16>
    %c0_1 = arith.constant 0 : index
    %c0_2 = arith.constant 0 : index
    %2 = vector.load %arg2[%c0_1, %c0_2] : memref<16x128xbf16, #tpu.memory_space<vmem>>, vector<16x128xbf16>
    %cst = arith.constant dense<0.000000e+00> : vector<8x128xf32>
    %3 = tpu.matmul %1, %2, %cst {dimension_numbers = #tpu.dot_dimension_numbers<[1], [0], [0], [1], [0, 0, 1, 1], [], []>} : vector<8x16xbf16>, vector<16x128xbf16>, vector<8x128xf32> -> vector<8x128xf32>
    %c0_3 = arith.constant 0 : index
    %c0_4 = arith.constant 0 : index
    %4 = vector.load %arg3[%c0_3, %c0_4] : memref<1x128xf32, #tpu.memory_space<vmem>>, vector<1x128xf32>
    %5 = vector.broadcast %4 : vector<1x128xf32> to vector<8x128xf32>
    %6 = arith.addf %3, %5 : vector<8x128xf32>
    %cst_5 = arith.constant 0.000000e+00 : f32
    %7 = vector.broadcast %cst_5 : f32 to vector<8x128xf32>
    %8 = arith.maximumf %6, %7 : vector<8x128xf32>
    %9 = arith.truncf %8 : vector<8x128xf32> to vector<8x128xbf16>
    %c0_6 = arith.constant 0 : index
    %c0_7 = arith.constant 0 : index
    %10 = vector.load %arg4[%c0_6, %c0_7] : memref<128x128xbf16, #tpu.memory_space<vmem>>, vector<128x128xbf16>
    %cst_8 = arith.constant dense<0.000000e+00> : vector<8x128xf32>
    %11 = tpu.matmul %9, %10, %cst_8 {dimension_numbers = #tpu.dot_dimension_numbers<[1], [0], [0], [1], [0, 0, 1, 1], [], []>} : vector<8x128xbf16>, vector<128x128xbf16>, vector<8x128xf32> -> vector<8x128xf32>
    %c0_9 = arith.constant 0 : index
    %c0_10 = arith.constant 0 : index
    %12 = vector.load %arg5[%c0_9, %c0_10] : memref<1x128xf32, #tpu.memory_space<vmem>>, vector<1x128xf32>
    %13 = vector.broadcast %12 : vector<1x128xf32> to vector<8x128xf32>
    %14 = arith.addf %11, %13 : vector<8x128xf32>
    %cst_11 = arith.constant 0.000000e+00 : f32
    %15 = vector.broadcast %cst_11 : f32 to vector<8x128xf32>
    %16 = arith.maximumf %14, %15 : vector<8x128xf32>
    %17 = arith.truncf %16 : vector<8x128xf32> to vector<8x128xbf16>
    %c0_12 = arith.constant 0 : index
    %c0_13 = arith.constant 0 : index
    %18 = vector.load %arg6[%c0_12, %c0_13] : memref<128x128xbf16, #tpu.memory_space<vmem>>, vector<128x128xbf16>
    %cst_14 = arith.constant dense<0.000000e+00> : vector<8x128xf32>
    %19 = tpu.matmul %17, %18, %cst_14 {dimension_numbers = #tpu.dot_dimension_numbers<[1], [0], [0], [1], [0, 0, 1, 1], [], []>} : vector<8x128xbf16>, vector<128x128xbf16>, vector<8x128xf32> -> vector<8x128xf32>
    %c0_15 = arith.constant 0 : index
    %c0_16 = arith.constant 0 : index
    %20 = vector.load %arg7[%c0_15, %c0_16] : memref<1x128xf32, #tpu.memory_space<vmem>>, vector<1x128xf32>
    %21 = vector.broadcast %20 : vector<1x128xf32> to vector<8x128xf32>
    %22 = arith.addf %19, %21 : vector<8x128xf32>
    %23 = tpu.iota {dimensions = array<i32: 0>} : vector<8x128xi32>
    %c8_i32 = arith.constant 8 : i32
    %24 = arith.muli %arg0, %c8_i32 : i32
    %25 = vector.broadcast %24 : i32 to vector<8x128xi32>
    %26 = arith.addi %23, %25 : vector<8x128xi32>
    %27 = tpu.iota {dimensions = array<i32: 1>} : vector<8x128xi32>
    %c4_i32 = arith.constant 4 : i32
    %28 = vector.broadcast %c4_i32 : i32 to vector<8x128xi32>
    %29 = arith.cmpi eq, %27, %28 : vector<8x128xi32>
    %cst_17 = arith.constant 0.000000e+00 : f32
    %30 = vector.broadcast %cst_17 : f32 to vector<8x128xf32>
    %31 = arith.select %29, %22, %30 : vector<8x128xi1>, vector<8x128xf32>
    %cst_18 = arith.constant dense<0.000000e+00> : vector<8xf32>
    %32 = vector.multi_reduction <add>, %31, %cst_18 [1] : vector<8x128xf32> to vector<8xf32>
    %33 = vector.shape_cast %32 : vector<8xf32> to vector<8x1xf32>
    %c2_i32 = arith.constant 2 : i32
    %34 = vector.broadcast %c2_i32 : i32 to vector<8x128xi32>
    %35 = arith.cmpi slt, %26, %34 : vector<8x128xi32>
    %c4_i32_19 = arith.constant 4 : i32
    %36 = vector.broadcast %c4_i32_19 : i32 to vector<8x128xi32>
    %37 = arith.cmpi slt, %27, %36 : vector<8x128xi32>
    %38 = arith.andi %35, %37 : vector<8x128xi1>
    %cst_20 = arith.constant 0.000000e+00 : f32
    %39 = vector.broadcast %cst_20 : f32 to vector<8x128xf32>
    %40 = arith.select %38, %22, %39 : vector<8x128xi1>, vector<8x128xf32>
    %cst_21 = arith.constant dense<0.000000e+00> : vector<8xf32>
    %41 = vector.multi_reduction <add>, %40, %cst_21 [1] : vector<8x128xf32> to vector<8xf32>
    %42 = vector.shape_cast %41 : vector<8xf32> to vector<8x1xf32>
    %cst_22 = arith.constant dense<0.000000e+00> : vector<1xf32>
    %43 = vector.multi_reduction <add>, %42, %cst_22 [0] : vector<8x1xf32> to vector<1xf32>
    %44 = vector.shape_cast %43 : vector<1xf32> to vector<1x1xf32>
    %cst_23 = arith.constant 1.250000e-01 : f32
    %45 = vector.broadcast %cst_23 : f32 to vector<1x1xf32>
    %46 = arith.mulf %44, %45 : vector<1x1xf32>
    %47 = vector.broadcast %33 : vector<8x1xf32> to vector<8x128xf32>
    %48 = arith.addf %22, %47 : vector<8x128xf32>
    %49 = vector.broadcast %46 : vector<1x1xf32> to vector<8x128xf32>
    %50 = arith.subf %48, %49 : vector<8x128xf32>
    %c0_24 = arith.constant 0 : index
    %c0_25 = arith.constant 0 : index
    %51 = vector.load %arg8[%c0_24, %c0_25] : memref<8x128xf32, #tpu.memory_space<vmem>>, vector<8x128xf32>
    tpu.vector_store %arg8[%c0_24, %c0_25], %50 {strides = array<i32>} : memref<8x128xf32, #tpu.memory_space<vmem>>, vector<8x128xf32>,
    return
  }
  func.func @transform_0(%arg0: i32) -> (i32, i32) {
    %c0_i32 = arith.constant 0 : i32
    %c0_i32_0 = arith.constant 0 : i32
    return %arg0, %c0_i32 : i32, i32
  }
  func.func @transform_1(%arg0: i32) -> (i32, i32) {
    %c0_i32 = arith.constant 0 : i32
    %c0_i32_0 = arith.constant 0 : i32
    %c0_i32_1 = arith.constant 0 : i32
    return %c0_i32, %c0_i32_0 : i32, i32
  }
  func.func @transform_2(%arg0: i32) -> (i32, i32) {
    %c0_i32 = arith.constant 0 : i32
    %c0_i32_0 = arith.constant 0 : i32
    %c0_i32_1 = arith.constant 0 : i32
    return %c0_i32, %c0_i32_0 : i32, i32
  }
  func.func @transform_3(%arg0: i32) -> (i32, i32) {
    %c0_i32 = arith.constant 0 : i32
    %c0_i32_0 = arith.constant 0 : i32
    %c0_i32_1 = arith.constant 0 : i32
    return %c0_i32, %c0_i32_0 : i32, i32
  }
  func.func @transform_4(%arg0: i32) -> (i32, i32) {
    %c0_i32 = arith.constant 0 : i32
    %c0_i32_0 = arith.constant 0 : i32
    %c0_i32_1 = arith.constant 0 : i32
    return %c0_i32, %c0_i32_0 : i32, i32
  }
  func.func @transform_5(%arg0: i32) -> (i32, i32) {
    %c0_i32 = arith.constant 0 : i32
    %c0_i32_0 = arith.constant 0 : i32
    %c0_i32_1 = arith.constant 0 : i32
    return %c0_i32, %c0_i32_0 : i32, i32
  }
  func.func @transform_6(%arg0: i32) -> (i32, i32) {
    %c0_i32 = arith.constant 0 : i32
    %c0_i32_0 = arith.constant 0 : i32
    %c0_i32_1 = arith.constant 0 : i32
    return %c0_i32, %c0_i32_0 : i32, i32
  }
  func.func @transform_7(%arg0: i32) -> (i32, i32) {
    %c0_i32 = arith.constant 0 : i32
    %c0_i32_0 = arith.constant 0 : i32
    return %arg0, %c0_i32 : i32, i32
  }
}

</mosaic_0001>

<llo_original>
// kernel: tpu_custom_call.1
$region0: #{tpu_custom_call.1}
  #allocation0 [shape = 'u32[]', space=smem, size = 0x4, offset = 0x4, fixed_abs, tag = 'smem constant byte address 0x4 - core index']
  #allocation1 [shape = 'u32[144,128]{1,0:T(1,128)}', space=vmem, size = 0x12000, scoped, tag = 'internal scratch']
  %s0 = inlined_call_operand.hbm [shape: f32[2,16], index: 0, kind: input, shape index: {}]
  %s1 = inlined_call_operand.hbm [shape: bf16[16,128], index: 1, kind: input, shape index: {}]
  %s2 = inlined_call_operand.vmem [shape: f32[1,128], index: 2, kind: input, shape index: {}]
  %s3 = inlined_call_operand.hbm [shape: bf16[128,128], index: 3, kind: input, shape index: {}]
  %s4 = inlined_call_operand.vmem [shape: f32[1,128], index: 4, kind: input, shape index: {}]
  %s5 = inlined_call_operand.hbm [shape: bf16[128,128], index: 5, kind: input, shape index: {}]
  %s6 = inlined_call_operand.vmem [shape: f32[1,128], index: 6, kind: input, shape index: {}]
  %s7 = inlined_call_operand.hbm [shape: f32[2,128], index: 7, kind: output, shape index: {}]
  %s8 = sld [smem:[#allocation0]]
  $region54: #{tpu_custom_call.1} parent=0
    _
  %s10 = ssub.s32 1, %s8
  %s11 = scalar_select 0, %s10, %s8
  $region1: #{tpu_custom_call.1} parent=0
    #allocation2 [shape = 'u8[4096]{0}', space=vmem, size = 0x1000, scoped, tag = 'input window, operand 0, single buffered']
    #allocation3 [shape = 's32[1]{0}', space=sflag, size = 0x4, scoped, tag = 'scoped memory for tpu_custom_call.1']
    #allocation4 [shape = 's32[1]{0}', space=sflag, size = 0x4, scoped, tag = 'scoped memory for tpu_custom_call.1']
    #allocation5 [shape = 'u8[4096]{0}', space=vmem, size = 0x1000, scoped, tag = 'input window, operand 1, single buffered']
    #allocation6 [shape = 's32[1]{0}', space=sflag, size = 0x4, scoped, tag = 'scoped memory for tpu_custom_call.1']
    #allocation7 [shape = 'u8[32768]{0}', space=vmem, size = 0x8000, scoped, tag = 'input window, operand 3, single buffered']
    #allocation8 [shape = 'u8[32768]{0}', space=vmem, size = 0x8000, scoped, tag = 'input window, operand 5, single buffered']
    #allocation9 [shape = 's32[1]{0}', space=sflag, size = 0x4, scoped, tag = 'scoped memory for tpu_custom_call.1']
    #allocation10 [shape = 'u8[4096]{0}', space=vmem, size = 0x1000, scoped, tag = 'output window, operand 0, single buffered']
    %12 = vsyncpa [#allocation3], 0
    %13 = vsyncpa [#allocation6], 0
    %14 = vsyncpa [#allocation9], 0
    %15 = vsyncpa [#allocation4], 0
    // Predicated region
    $region2: #{tpu_custom_call.1} parent=1 // pred_check
      _
    $region3: #{tpu_custom_call.1} parent=1 // pred_check_branch
      %17 = sbr.rel (0) target = $region5
    $region4: #{tpu_custom_call.1} parent=1 // pred_region
      %s19 = ssub.s32 128, 32
      %20 = vsyncadd [#allocation3], %s19
      %s21 = sshll.u32 [#allocation2], 4
      %s22 = int_to_ptr.vmem [resolvable:$true] %s21
      %27 = dma.hbm_to_vmem [thread:$0]  %s0, 32, %s22, [#allocation3], 32, 32, 2
    $region5: #{tpu_custom_call.1} parent=1 // pred_fallthru
      _
    // Predicated region
    $region6: #{tpu_custom_call.1} parent=1 // pred_check
      _
    $region7: #{tpu_custom_call.1} parent=1 // pred_check_branch
      %29 = sbr.rel (0) target = $region9
    $region8: #{tpu_custom_call.1} parent=1 // pred_region
      %s31 = ssub.s32 128, 128
      %32 = vsyncadd [#allocation6], %s31
      %s33 = sshll.u32 [#allocation5], 4
      %s34 = int_to_ptr.vmem [resolvable:$true] %s33
      %39 = dma.hbm_to_vmem [thread:$0]  %s1, 128, %s34, [#allocation6], 64, 64, 4
    $region9: #{tpu_custom_call.1} parent=1 // pred_fallthru
      _
    // Predicated region
    $region10: #{tpu_custom_call.1} parent=1 // pred_check
      _
    $region11: #{tpu_custom_call.1} parent=1 // pred_check_branch
      %41 = sbr.rel (0) target = $region13
    $region12: #{tpu_custom_call.1} parent=1 // pred_region
      _
    $region13: #{tpu_custom_call.1} parent=1 // pred_fallthru
      _
    // Predicated region
    $region14: #{tpu_custom_call.1} parent=1 // pred_check
      _
    $region15: #{tpu_custom_call.1} parent=1 // pred_check_branch
      %43 = sbr.rel (0) target = $region17
    $region16: #{tpu_custom_call.1} parent=1 // pred_region
      %s45 = ssub.s32 1024, 1024
      %46 = vsyncadd [#allocation6], %s45
      %s47 = sshll.u32 [#allocation7], 4
      %s48 = int_to_ptr.vmem [resolvable:$true] %s47
      %53 = dma.hbm_to_vmem [thread:$0]  %s3, 1024, %s48, [#allocation6], 64, 64, 4
    $region17: #{tpu_custom_call.1} parent=1 // pred_fallthru
      _
    // Predicated region
    $region18: #{tpu_custom_call.1} parent=1 // pred_check
      _
    $region19: #{tpu_custom_call.1} parent=1 // pred_check_branch
      %55 = sbr.rel (0) target = $region21
    $region20: #{tpu_custom_call.1} parent=1 // pred_region
      _
    $region21: #{tpu_custom_call.1} parent=1 // pred_fallthru
      _
    // Predicated region
    $region22: #{tpu_custom_call.1} parent=1 // pred_check
      _
    $region23: #{tpu_custom_call.1} parent=1 // pred_check_branch
      %57 = sbr.rel (0) target = $region25
    $region24: #{tpu_custom_call.1} parent=1 // pred_region
      %s59 = ssub.s32 1024, 1024
      %60 = vsyncadd [#allocation9], %s59
      %s61 = sshll.u32 [#allocation8], 4
      %s62 = int_to_ptr.vmem [resolvable:$true] %s61
      %67 = dma.hbm_to_vmem [thread:$0]  %s5, 1024, %s62, [#allocation9], 64, 64, 4
    $region25: #{tpu_custom_call.1} parent=1 // pred_fallthru
      _
    // Predicated region
    $region26: #{tpu_custom_call.1} parent=1 // pred_check
      _
    $region27: #{tpu_custom_call.1} parent=1 // pred_check_branch
      %69 = sbr.rel (0) target = $region29
    $region28: #{tpu_custom_call.1} parent=1 // pred_region
      _
    $region29: #{tpu_custom_call.1} parent=1 // pred_fallthru
      _
    // Predicated region
    $region30: #{tpu_custom_call.1} parent=1 // pred_check
      _
    $region31: #{tpu_custom_call.1} parent=1 // pred_check_branch
      %71 = sbr.rel (0) target = $region33
    $region32: #{tpu_custom_call.1} parent=1 // pred_region
      %72 = dma.done [#allocation3], 128
    $region33: #{tpu_custom_call.1} parent=1 // pred_fallthru
      _
    // Predicated region
    $region34: #{tpu_custom_call.1} parent=1 // pred_check
      _
    $region35: #{tpu_custom_call.1} parent=1 // pred_check_branch
      %74 = sbr.rel (0) target = $region37
    $region36: #{tpu_custom_call.1} parent=1 // pred_region
      %75 = dma.done [#allocation6], 128
    $region37: #{tpu_custom_call.1} parent=1 // pred_fallthru
      _
    // Predicated region
    $region38: #{tpu_custom_call.1} parent=1 // pred_check
      _
    $region39: #{tpu_custom_call.1} parent=1 // pred_check_branch
      %77 = sbr.rel (0) target = $region41
    $region40: #{tpu_custom_call.1} parent=1 // pred_region
      %78 = dma.done [#allocation6], 1024
    $region41: #{tpu_custom_call.1} parent=1 // pred_fallthru
      _
    // Predicated region
    $region42: #{tpu_custom_call.1} parent=1 // pred_check
      _
    $region43: #{tpu_custom_call.1} parent=1 // pred_check_branch
      %80 = sbr.rel (0) target = $region45
    $region44: #{tpu_custom_call.1} parent=1 // pred_region
      %81 = dma.done [#allocation9], 1024
    $region45: #{tpu_custom_call.1} parent=1 // pred_fallthru
      _
    %v83 = vld [vmem:[#allocation2] sm:$0xff]
    %v84 = vpack.c.bf16 %v83, %v83
    %v85 = vld [vmem:[#allocation5] sm:$0xf]
    %v86 = vld [vmem:[#allocation5 + $0x4] sm:$0xf]
    %v87 = vld [vmem:[%s2] sm:$0x1]
    %v89 = vlaneseq
    %v90 = vshrl.u32 %v89, 7
    %v91 = vsub.s32 0, %v90
    %v92 = vrot.slane %v87, %v91
    %v96 = vunpack.c.l.b16 %v85
    %v97 = vunpack.c.l.b16 %v86
    %v98 = vpack.c.b16 %v97, %v96
    %vm100 = vcmask 130048
    %v102 = vsel %vm100, %v84, 0
    %104 = vmatprep.subr.bf16.mxu0 0
    %105 = vmatpush1.bf16.msra.mxu0 0
    %106 = vmatprep.subr.bf16.mxu0 0
    %107 = vmatpush1.bf16.msra.mxu0 0
    %108 = vmatprep.subr.bf16.mxu0 0
    %109 = vmatpush1.bf16.msra.mxu0 0
    %110 = vmatprep.subr.bf16.mxu0 0
    %111 = vmatpush1.bf16.msra.mxu0 0
    %112 = vmatprep.subr.bf16.mxu0 0
    %113 = vmatpush1.bf16.msra.mxu0 0
    %114 = vmatprep.subr.bf16.mxu0 0
    %115 = vmatpush1.bf16.msra.mxu0 0
    %116 = vmatprep.subr.bf16.mxu0 0
    %117 = vmatpush1.bf16.msra.mxu0 0
    %118 = vmatprep.subr.bf16.mxu0 0
    %119 = vmatpush1.bf16.msra.mxu0 %v98
    %120 = vmatprep.subr.bf16.mxu0 0
    %121 = vmatpush2.bf16.msra.mxu0 0
    %122 = vmatprep.subr.bf16.mxu0 0
    %123 = vmatpush2.bf16.msra.mxu0 0
    %124 = vmatprep.subr.bf16.mxu0 0
    %125 = vmatpush2.bf16.msra.mxu0 0
    %126 = vmatprep.subr.bf16.mxu0 0
    %127 = vmatpush2.bf16.msra.mxu0 0
    %128 = vmatprep.subr.bf16.mxu0 0
    %129 = vmatpush2.bf16.msra.mxu0 0
    %130 = vmatprep.subr.bf16.mxu0 0
    %131 = vmatpush2.bf16.msra.mxu0 0
    %132 = vmatprep.subr.bf16.mxu0 0
    %133 = vmatpush2.bf16.msra.mxu0 0
    %134 = vmatprep.subr.bf16.mxu0 0
    %135 = vmatpush2.bf16.msra.mxu0 0
    %136 = vmatprep.mubr.bf16.mxu0 0
    %137 = vmatmul.mubr.bf16.gmra.mxu0 %v102
    %v138 = vpop.f32.mrf.mxu0
    %v139 = vadd.f32 %v92, %v138
    %v140 = vpop.f32.mrf.mxu0
    %v141 = vpop.f32.mrf.mxu0
    %v142 = vpop.f32.mrf.mxu0
    %143 = vdwg.mxu0
    %v144 = vmax.f32 %v139, 0.0
    %v145 = vpack.c.bf16 %v144, %v144
    %v146 = vld [vmem:[#allocation7] sm:$0xf]
    %v147 = vld [vmem:[#allocation7 + $0x4] sm:$0xf]
    %v148 = vld [vmem:[#allocation7 + $0x8] sm:$0xf]
    %v149 = vld [vmem:[#allocation7 + $0xc] sm:$0xf]
    %v150 = vld [vmem:[#allocation7 + $0x10] sm:$0xf]
    %v151 = vld [vmem:[#allocation7 + $0x14] sm:$0xf]
    %v152 = vld [vmem:[#allocation7 + $0x18] sm:$0xf]
    %v153 = vld [vmem:[#allocation7 + $0x1c] sm:$0xf]
    %v154 = vld [vmem:[#allocation7 + $0x20] sm:$0xf]
    %v155 = vld [vmem:[#allocation7 + $0x24] sm:$0xf]
    %v156 = vld [vmem:[#allocation7 + $0x28] sm:$0xf]
    %v157 = vld [vmem:[#allocation7 + $0x2c] sm:$0xf]
    %v158 = vld [vmem:[#allocation7 + $0x30] sm:$0xf]
    %v159 = vld [vmem:[#allocation7 + $0x34] sm:$0xf]
    %v160 = vld [vmem:[#allocation7 + $0x38] sm:$0xf]
    %v161 = vld [vmem:[#allocation7 + $0x3c] sm:$0xf]
    %v162 = vld [vmem:[%s4] sm:$0x1]
    %v164 = vlaneseq
    %v165 = vshrl.u32 %v164, 7
    %v166 = vsub.s32 0, %v165
    %v167 = vrot.slane %v162, %v166
    %v185 = vunpack.c.l.b16 %v146
    %v186 = vunpack.c.l.b16 %v147
    %v187 = vunpack.c.l.b16 %v148
    %v188 = vunpack.c.l.b16 %v149
    %v189 = vunpack.c.l.b16 %v150
    %v190 = vunpack.c.l.b16 %v151
    %v191 = vunpack.c.l.b16 %v152
    %v192 = vunpack.c.l.b16 %v153
    %v193 = vunpack.c.l.b16 %v154
    %v194 = vunpack.c.l.b16 %v155
    %v195 = vunpack.c.l.b16 %v156
    %v196 = vunpack.c.l.b16 %v157
    %v197 = vunpack.c.l.b16 %v158
    %v198 = vunpack.c.l.b16 %v159
    %v199 = vunpack.c.l.b16 %v160
    %v200 = vunpack.c.l.b16 %v161
    %v201 = vpack.c.b16 %v186, %v185
    %v202 = vpack.c.b16 %v188, %v187
    %v203 = vpack.c.b16 %v190, %v189
    %v204 = vpack.c.b16 %v192, %v191
    %v205 = vpack.c.b16 %v194, %v193
    %v206 = vpack.c.b16 %v196, %v195
    %v207 = vpack.c.b16 %v198, %v197
    %v208 = vpack.c.b16 %v200, %v199
    %217 = vmatprep.subr.bf16.mxu0 0
    %218 = vmatpush1.bf16.msra.mxu0 %v208
    %219 = vmatprep.subr.bf16.mxu0 0
    %220 = vmatpush1.bf16.msra.mxu0 %v207
    %221 = vmatprep.subr.bf16.mxu0 0
    %222 = vmatpush1.bf16.msra.mxu0 %v206
    %223 = vmatprep.subr.bf16.mxu0 0
    %224 = vmatpush1.bf16.msra.mxu0 %v205
    %225 = vmatprep.subr.bf16.mxu0 0
    %226 = vmatpush1.bf16.msra.mxu0 %v204
    %227 = vmatprep.subr.bf16.mxu0 0
    %228 = vmatpush1.bf16.msra.mxu0 %v203
    %229 = vmatprep.subr.bf16.mxu0 0
    %230 = vmatpush1.bf16.msra.mxu0 %v202
    %231 = vmatprep.subr.bf16.mxu0 0
    %232 = vmatpush1.bf16.msra.mxu0 %v201
    %233 = vmatprep.subr.bf16.mxu0 0
    %234 = vmatpush2.bf16.msra.mxu0 0
    %235 = vmatprep.subr.bf16.mxu0 0
    %236 = vmatpush2.bf16.msra.mxu0 0
    %237 = vmatprep.subr.bf16.mxu0 0
    %238 = vmatpush2.bf16.msra.mxu0 0
    %239 = vmatprep.subr.bf16.mxu0 0
    %240 = vmatpush2.bf16.msra.mxu0 0
    %241 = vmatprep.subr.bf16.mxu0 0
    %242 = vmatpush2.bf16.msra.mxu0 0
    %243 = vmatprep.subr.bf16.mxu0 0
    %244 = vmatpush2.bf16.msra.mxu0 0
    %245 = vmatprep.subr.bf16.mxu0 0
    %246 = vmatpush2.bf16.msra.mxu0 0
    %247 = vmatprep.subr.bf16.mxu0 0
    %248 = vmatpush2.bf16.msra.mxu0 0
    %249 = vmatprep.mubr.bf16.mxu0 0
    %250 = vmatmul.mubr.bf16.gmra.mxu0 %v145
    %v251 = vpop.f32.mrf.mxu0
    %v252 = vadd.f32 %v167, %v251
    %v253 = vpop.f32.mrf.mxu0
    %v254 = vpop.f32.mrf.mxu0
    %v255 = vpop.f32.mrf.mxu0
    %256 = vdwg.mxu0
    %v257 = vmax.f32 %v252, 0.0
    %v258 = vpack.c.bf16 %v257, %v257
    %v259 = vld [vmem:[#allocation8] sm:$0xf]
    %v260 = vld [vmem:[#allocation8 + $0x4] sm:$0xf]
    %v261 = vld [vmem:[#allocation8 + $0x8] sm:$0xf]
    %v262 = vld [vmem:[#allocation8 + $0xc] sm:$0xf]
    %v263 = vld [vmem:[#allocation8 + $0x10] sm:$0xf]
    %v264 = vld [vmem:[#allocation8 + $0x14] sm:$0xf]
    %v265 = vld [vmem:[#allocation8 + $0x18] sm:$0xf]
    %v266 = vld [vmem:[#allocation8 + $0x1c] sm:$0xf]
    %v267 = vld [vmem:[#allocation8 + $0x20] sm:$0xf]
    %v268 = vld [vmem:[#allocation8 + $0x24] sm:$0xf]
    %v269 = vld [vmem:[#allocation8 + $0x28] sm:$0xf]
    %v270 = vld [vmem:[#allocation8 + $0x2c] sm:$0xf]
    %v271 = vld [vmem:[#allocation8 + $0x30] sm:$0xf]
    %v272 = vld [vmem:[#allocation8 + $0x34] sm:$0xf]
    %v273 = vld [vmem:[#allocation8 + $0x38] sm:$0xf]
    %v274 = vld [vmem:[#allocation8 + $0x3c] sm:$0xf]
    %v275 = vld [vmem:[%s6] sm:$0x1]
    %v277 = vlaneseq
    %v278 = vshrl.u32 %v277, 7
    %v279 = vsub.s32 0, %v278
    %v280 = vrot.slane %v275, %v279
    %v298 = vunpack.c.l.b16 %v259
    %v299 = vunpack.c.l.b16 %v260
    %v300 = vunpack.c.l.b16 %v261
    %v301 = vunpack.c.l.b16 %v262
    %v302 = vunpack.c.l.b16 %v263
    %v303 = vunpack.c.l.b16 %v264
    %v304 = vunpack.c.l.b16 %v265
    %v305 = vunpack.c.l.b16 %v266
    %v306 = vunpack.c.l.b16 %v267
    %v307 = vunpack.c.l.b16 %v268
    %v308 = vunpack.c.l.b16 %v269
    %v309 = vunpack.c.l.b16 %v270
    %v310 = vunpack.c.l.b16 %v271
    %v311 = vunpack.c.l.b16 %v272
    %v312 = vunpack.c.l.b16 %v273
    %v313 = vunpack.c.l.b16 %v274
    %v314 = vpack.c.b16 %v299, %v298
    %v315 = vpack.c.b16 %v301, %v300
    %v316 = vpack.c.b16 %v303, %v302
    %v317 = vpack.c.b16 %v305, %v304
    %v318 = vpack.c.b16 %v307, %v306
    %v319 = vpack.c.b16 %v309, %v308
    %v320 = vpack.c.b16 %v311, %v310
    %v321 = vpack.c.b16 %v313, %v312
    %330 = vmatprep.subr.bf16.mxu0 0
    %331 = vmatpush1.bf16.msra.mxu0 %v321
    %332 = vmatprep.subr.bf16.mxu0 0
    %333 = vmatpush1.bf16.msra.mxu0 %v320
    %334 = vmatprep.subr.bf16.mxu0 0
    %335 = vmatpush1.bf16.msra.mxu0 %v319
    %336 = vmatprep.subr.bf16.mxu0 0
    %337 = vmatpush1.bf16.msra.mxu0 %v318
    %338 = vmatprep.subr.bf16.mxu0 0
    %339 = vmatpush1.bf16.msra.mxu0 %v317
    %340 = vmatprep.subr.bf16.mxu0 0
    %341 = vmatpush1.bf16.msra.mxu0 %v316
    %342 = vmatprep.subr.bf16.mxu0 0
    %343 = vmatpush1.bf16.msra.mxu0 %v315
    %344 = vmatprep.subr.bf16.mxu0 0
    %345 = vmatpush1.bf16.msra.mxu0 %v314
    %346 = vmatprep.subr.bf16.mxu0 0
    %347 = vmatpush2.bf16.msra.mxu0 0
    %348 = vmatprep.subr.bf16.mxu0 0
    %349 = vmatpush2.bf16.msra.mxu0 0
    %350 = vmatprep.subr.bf16.mxu0 0
    %351 = vmatpush2.bf16.msra.mxu0 0
    %352 = vmatprep.subr.bf16.mxu0 0
    %353 = vmatpush2.bf16.msra.mxu0 0
    %354 = vmatprep.subr.bf16.mxu0 0
    %355 = vmatpush2.bf16.msra.mxu0 0
    %356 = vmatprep.subr.bf16.mxu0 0
    %357 = vmatpush2.bf16.msra.mxu0 0
    %358 = vmatprep.subr.bf16.mxu0 0
    %359 = vmatpush2.bf16.msra.mxu0 0
    %360 = vmatprep.subr.bf16.mxu0 0
    %361 = vmatpush2.bf16.msra.mxu0 0
    %362 = vmatprep.mubr.bf16.mxu0 0
    %363 = vmatmul.mubr.bf16.gmra.mxu0 %v258
    %v364 = vpop.f32.mrf.mxu0
    %v365 = vadd.f32 %v280, %v364
    %v366 = vpop.f32.mrf.mxu0
    %v367 = vpop.f32.mrf.mxu0
    %v368 = vpop.f32.mrf.mxu0
    %369 = vdwg.mxu0
    %v370 = vlaneseq
    %v371 = vshrl.u32 %v370, 7
    %s372 = smul.u32 0, 8
    %v373 = vstv %s372
    %v374 = vadd.s32 %v371, %v373
    %v375 = vlaneseq
    %v376 = vand.u32 %v375, 127
    %vm377 = vcmp.eq.s32.totalorder %v376, 4
    %v378 = vsel %vm377, %v365, 0.0
    %379 = vadd.xlane.f32.xlu0 %v378
    %v380 = vpop.xlane.xlu0 %379
    %vm381 = vcmp.lt.s32.totalorder %v374, 2
    %vm382 = vcmp.lt.s32.totalorder %v376, 4
    %vm383 = vmand %vm381, %vm382
    %v384 = vsel %vm383, %v365, 0.0
    %385 = vadd.xlane.f32.xlu0 %v384
    %v386 = vpop.xlane.xlu0 %385
    %v387 = vrot.slane %v386, 4
    %v388 = vadd.f32 %v386, %v387
    %v389 = vrot.slane %v388, 2
    %v390 = vadd.f32 %v388, %v389
    %v391 = vrot.slane %v390, 1
    %v392 = vadd.f32 %v390, %v391
    %v393 = vmul.f32 %v392, 0.125
    %v394 = vadd.f32 %v365, %v380
    %v395 = vsub.f32 %v394, %v393
    %396 = vst [vmem:[#allocation10] sm:$0xff] %v395
    // Predicated region
    $region46: #{tpu_custom_call.1} parent=1 // pred_check
      _
    $region47: #{tpu_custom_call.1} parent=1 // pred_check_branch
      %398 = sbr.rel (0) target = $region49
    $region48: #{tpu_custom_call.1} parent=1 // pred_region
      %s400 = ssub.s32 128, 32
      %401 = vsyncadd [#allocation4], %s400
      %s402 = sshll.u32 [#allocation10], 4
      %s403 = int_to_ptr.vmem [resolvable:$true] %s402
      %408 = dma.vmem_to_hbm [thread:$0]  %s403, 32, %s7, [#allocation4], 32, 32, 2
    $region49: #{tpu_custom_call.1} parent=1 // pred_fallthru
      _
    // Predicated region
    $region50: #{tpu_custom_call.1} parent=1 // pred_check
      _
    $region51: #{tpu_custom_call.1} parent=1 // pred_check_branch
      %410 = sbr.rel (0) target = $region53
    $region52: #{tpu_custom_call.1} parent=1 // pred_region
      %411 = dma.done [#allocation4], 128
    $region53: #{tpu_custom_call.1} parent=1 // pred_fallthru
      _
    %412 = vsyncpa [#allocation3], 1
    %413 = vsyncpa [#allocation6], 1
    %414 = vsyncpa [#allocation9], 1
    %415 = vsyncpa [#allocation4], 1

</llo_original>
